<compile_context>
chip_gen: v6e
topology: v6e:2x2x1
jax: 0.10.0
libtpu: 0.0.40
codegen_flags: <defaults>
</compile_context>

<pallas_src>
import functools

import jax
import jax.numpy as jnp
from jax.experimental import pallas as pl
from jax.experimental.pallas import tpu as pltpu


IN_DIM = 28 * 28
OUT_DIM = 10
OUT_PAD = 128  # lane-dense output width


def _round_up(x, m):
    return ((x + m - 1) // m) * m


def mlp_kernel(
    x_ref,        # VMEM (TB, 784)            bf16
    w_in_ref,     # VMEM (784, H)             bf16
    b_in_ref,     # VMEM (1, H)               f32
    wh_ref,       # VMEM (num_hidden, H, H)   bf16  (pre-scaled by 1/(1-p))
    bh_ref,       # VMEM (num_hidden, 1, H)   f32
    w_out_ref,    # VMEM (H, OUT_PAD)         bf16  (pre-scaled, zero-padded cols)
    b_out_ref,    # VMEM (1, OUT_PAD)         f32   (-1e30 in padded cols)
    bits_ref,     # VMEM (1+num_hidden, TB, H) uint32 dropout bits
    out_ref,      # VMEM (TB, OUT_PAD)        f32
    *,
    num_hidden,
    dropout_rate,
):
    apply_dropout = dropout_rate > 0.0
    if apply_dropout:
        keep_threshold = jnp.uint32(int((1.0 - dropout_rate) * float(2**32)))

    def relu_dropout(h_f32, layer_idx):
        h_f32 = jnp.maximum(h_f32, 0.0)
        if apply_dropout:
            bits = bits_ref[layer_idx]                       # (TB, H) uint32
            h_f32 = jnp.where(bits < keep_threshold, h_f32, 0.0)
        # next matmul consumes bf16 operands (f32 accumulation via
        # preferred_element_type); the 1/(1-p) scale is folded into the
        # next layer's weights in the wrapper.
        return h_f32.astype(jnp.bfloat16)

    # input layer
    h = jnp.dot(x_ref[...], w_in_ref[...],
                preferred_element_type=jnp.float32) + b_in_ref[...]
    h = relu_dropout(h, 0)

    # hidden layers (num_hidden is a static Python int -> unrolled)
    for i in range(num_hidden):
        h = jnp.dot(h, wh_ref[i],
                    preferred_element_type=jnp.float32) + bh_ref[i]
        h = relu_dropout(h, 1 + i)

    # output layer (lane-dense, padded to OUT_PAD) + log_softmax over dim=1.
    # Padded columns have logit = -1e30: they never win the max and their exp
    # underflows to 0, so the first OUT_DIM columns are an exact log_softmax.
    logits = jnp.dot(h, w_out_ref[...],
                     preferred_element_type=jnp.float32) + b_out_ref[...]
    m = jnp.max(logits, axis=1, keepdims=True)
    shifted = logits - m
    lse = jnp.log(jnp.sum(jnp.exp(shifted), axis=1, keepdims=True))
    out_ref[...] = shifted - lse


def model_fully_connected(x_nchw, params, *, num_hidden, dropout_rate, seed=0):
    """Forward pass. x_nchw: (B, 1, 28, 28) float32. Returns (B, 10) log-probs.

    Note: callers must vary `seed` per training step to get fresh dropout masks.
    """
    assert 0.0 <= dropout_rate < 1.0, "dropout_rate must be in [0, 1)"
    B = x_nchw.shape[0]
    H = params["w_in"].shape[1]

    # Batch tiling: MXU-sized tiles at scale, minimal (8-row) tile for tiny B.
    TB = min(256, _round_up(max(B, 1), 8))
    num_blocks = pl.cdiv(B, TB)
    B_pad = num_blocks * TB

    # ---- host-side prep (done once per call, outside the kernel) ----
    x = x_nchw.reshape(B, IN_DIM).astype(jnp.float32)
    if B_pad != B:
        x = jnp.pad(x, ((0, B_pad - B), (0, 0)))
    x = x.astype(jnp.bfloat16)

    inv_keep = 1.0 / (1.0 - dropout_rate) if dropout_rate > 0.0 else 1.0

    w_in = params["w_in"].astype(jnp.bfloat16)                       # (784, H)
    b_in = params["b_in"].astype(jnp.float32)                        # (1, H)
    # Fold the dropout 1/(1-p) scale into the weights that consume a
    # dropped-out input (all hidden layers and the output layer).
    wh = (params["wh"] * inv_keep).astype(jnp.bfloat16)              # (nh, H, H)
    bh = params["bh"].astype(jnp.float32)                            # (nh, 1, H)
    w_out = jnp.pad(params["w_out"] * inv_keep,
                    ((0, 0), (0, OUT_PAD - OUT_DIM))).astype(jnp.bfloat16)
    b_out = jnp.pad(params["b_out"],
                    ((0, 0), (0, OUT_PAD - OUT_DIM)),
                    constant_values=-1e30).astype(jnp.float32)

    n_drop = 1 + num_hidden
    if dropout_rate > 0.0:
        bits = jax.random.bits(jax.random.PRNGKey(seed),
                               (n_drop, B_pad, H), dtype=jnp.uint32)
    else:
        bits = jnp.zeros((n_drop, B_pad, H), dtype=jnp.uint32)

    kernel = functools.partial(
        mlp_kernel, num_hidden=num_hidden, dropout_rate=dropout_rate
    )

    out_padded = pl.pallas_call(
        kernel,
        out_shape=jax.ShapeDtypeStruct((B_pad, OUT_PAD), jnp.float32),
        grid=(num_blocks,),
        in_specs=[
            pl.BlockSpec((TB, IN_DIM), lambda i: (i, 0)),          # x: per-tile
            pl.BlockSpec(w_in.shape, lambda i: (0, 0)),            # resident
            pl.BlockSpec(b_in.shape, lambda i: (0, 0)),            # resident
            pl.BlockSpec(wh.shape, lambda i: (0, 0, 0)),           # resident
            pl.BlockSpec(bh.shape, lambda i: (0, 0, 0)),           # resident
            pl.BlockSpec(w_out.shape, lambda i: (0, 0)),           # resident
            pl.BlockSpec(b_out.shape, lambda i: (0, 0)),           # resident
            pl.BlockSpec((n_drop, TB, H), lambda i: (0, i, 0)),    # bits: per-tile
        ],
        out_specs=pl.BlockSpec((TB, OUT_PAD), lambda i: (i, 0)),
        compiler_params=pltpu.CompilerParams(
            dimension_semantics=("parallel",),
        ),
    )(x, w_in, b_in, wh, bh, w_out, b_out, bits)

    return out_padded[:B, :OUT_DIM]


def init_params(key, num_hidden=1, hidden_size=32):
    """Deterministic init mimicking nn.Linear's U(-1/sqrt(fan_in), 1/sqrt(fan_in))."""
    keys = jax.random.split(key, 3 + 2 * num_hidden)

    def linear(k, fan_in, fan_out):
        kw, kb = jax.random.split(k)
        bound = 1.0 / jnp.sqrt(fan_in)
        w = jax.random.uniform(kw, (fan_in, fan_out), jnp.float32, -bound, bound)
        b = jax.random.uniform(kb, (1, fan_out), jnp.float32, -bound, bound)
        return w, b

    w_in, b_in = linear(keys[0], IN_DIM, hidden_size)
    wh_list, bh_list = [], []
    for i in range(num_hidden):
        w, b = linear(keys[1 + i], hidden_size, hidden_size)
        wh_list.append(w)
        bh_list.append(b)
    w_out, b_out = linear(keys[-1], hidden_size, OUT_DIM)

    return {
        "w_in": w_in,
        "b_in": b_in,
        "wh": jnp.stack(wh_list, axis=0),        # (num_hidden, H, H)
        "bh": jnp.stack(bh_list, axis=0),        # (num_hidden, 1, H)
        "w_out": w_out,                          # (H, 10)
        "b_out": b_out,                          # (1, 10)
    }


if __name__ == "__main__":
    num_hidden = 1
    hidden_size = 32
    dropout_rate = 0.5

    key = jax.random.PRNGKey(0)
    pkey, xkey = jax.random.split(key)
    params = init_params(pkey, num_hidden=num_hidden, hidden_size=hidden_size)

    # Small batch of MNIST-shaped inputs (NCHW).
    x = jax.random.normal(xkey, (2, 1, 28, 28), dtype=jnp.float32)

    out = model_fully_connected(
        x, params, num_hidden=num_hidden, dropout_rate=dropout_rate, seed=0
    )
    out = jax.block_until_ready(out)

    assert out.shape == (2, 10)
    # log_softmax rows should exponentiate-sum to ~1.
    row_sums = jnp.sum(jnp.exp(out), axis=1)
    assert jnp.allclose(row_sums, 1.0, atol=1e-3), row_sums

    # Also sanity-check the dropout_rate == 0.0 static path.
    out_nodrop = jax.block_until_ready(
        model_fully_connected(x, params, num_hidden=num_hidden, dropout_rate=0.0)
    )
    assert out_nodrop.shape == (2, 10)
    assert jnp.allclose(jnp.sum(jnp.exp(out_nodrop), axis=1), 1.0, atol=1e-3)

    print("KERNEL_OK")
</pallas_src>

<mosaic_0001>
module attributes {stable_mosaic.version = 11 : i64} {
  func.func @mlp_kernel(%arg0: i32, %arg1: memref<8x784xbf16, #tpu.memory_space<vmem>>, %arg2: memref<784x32xbf16, #tpu.memory_space<vmem>>, %arg3: memref<1x32xf32, #tpu.memory_space<vmem>>, %arg4: memref<1x32x32xbf16, #tpu.memory_space<vmem>>, %arg5: memref<1x1x32xf32, #tpu.memory_space<vmem>>, %arg6: memref<32x128xbf16, #tpu.memory_space<vmem>>, %arg7: memref<1x128xf32, #tpu.memory_space<vmem>>, %arg8: memref<2x8x32xi32, #tpu.memory_space<vmem>>, %arg9: memref<8x128xf32, #tpu.memory_space<vmem>>) attributes {dimension_semantics = [#tpu.dimension_semantics<parallel>], iteration_bounds = array<i64: 1>, scalar_prefetch = 0 : i64, scratch_operands = 0 : i64, tpu.core_type = #tpu.core_type<tc>, window_params = [{transform_indices = @transform_0, window_bounds = array<i64: 8, 784>}, {pipeline_mode = #tpu.pipeline_mode<synchronous>, transform_indices = @transform_1, window_bounds = array<i64: 784, 32>}, {pipeline_mode = #tpu.pipeline_mode<synchronous>, transform_indices = @transform_2, window_bounds = array<i64: 1, 32>}, {pipeline_mode = #tpu.pipeline_mode<synchronous>, transform_indices = @transform_3, window_bounds = array<i64: 1, 32, 32>}, {pipeline_mode = #tpu.pipeline_mode<synchronous>, transform_indices = @transform_4, window_bounds = array<i64: 1, 1, 32>}, {pipeline_mode = #tpu.pipeline_mode<synchronous>, transform_indices = @transform_5, window_bounds = array<i64: 32, 128>}, {pipeline_mode = #tpu.pipeline_mode<synchronous>, transform_indices = @transform_6, window_bounds = array<i64: 1, 128>}, {transform_indices = @transform_7, window_bounds = array<i64: 2, 8, 32>}, {transform_indices = @transform_8, window_bounds = array<i64: 8, 128>}]} {
    %c0 = arith.constant 0 : index
    %c0_0 = arith.constant 0 : index
    %0 = vector.load %arg1[%c0, %c0_0] : memref<8x784xbf16, #tpu.memory_space<vmem>>, vector<8x784xbf16>
    %c0_1 = arith.constant 0 : index
    %c0_2 = arith.constant 0 : index
    %1 = vector.load %arg2[%c0_1, %c0_2] : memref<784x32xbf16, #tpu.memory_space<vmem>>, vector<784x32xbf16>
    %cst = arith.constant dense<0.000000e+00> : vector<8x32xf32>
    %2 = tpu.matmul %0, %1, %cst {dimension_numbers = #tpu.dot_dimension_numbers<[1], [0], [0], [1], [0, 0, 1, 1], [], []>} : vector<8x784xbf16>, vector<784x32xbf16>, vector<8x32xf32> -> vector<8x32xf32>
    %c0_3 = arith.constant 0 : index
    %c0_4 = arith.constant 0 : index
    %3 = vector.load %arg3[%c0_3, %c0_4] : memref<1x32xf32, #tpu.memory_space<vmem>>, vector<1x32xf32>
    %4 = vector.broadcast %3 : vector<1x32xf32> to vector<8x32xf32>
    %5 = arith.addf %2, %4 : vector<8x32xf32>
    %cst_5 = arith.constant 0.000000e+00 : f32
    %6 = vector.broadcast %cst_5 : f32 to vector<8x32xf32>
    %7 = arith.maximumf %5, %6 : vector<8x32xf32>
    %c0_6 = arith.constant 0 : index
    %c0_7 = arith.constant 0 : index
    %c0_8 = arith.constant 0 : index
    %8 = vector.load %arg8[%c0_6, %c0_7, %c0_8] : memref<2x8x32xi32, #tpu.memory_space<vmem>>, vector<1x8x32xi32>
    %9 = vector.shape_cast %8 : vector<1x8x32xi32> to vector<8x32xi32>
    %c-2147483648_i32 = arith.constant -2147483648 : i32
    %10 = vector.broadcast %c-2147483648_i32 : i32 to vector<8x32xi32>
    %11 = arith.cmpi ult, %9, %10 : vector<8x32xi32>
    %cst_9 = arith.constant 0.000000e+00 : f32
    %12 = vector.broadcast %cst_9 : f32 to vector<8x32xf32>
    %13 = arith.select %11, %7, %12 : vector<8x32xi1>, vector<8x32xf32>
    %14 = arith.truncf %13 : vector<8x32xf32> to vector<8x32xbf16>
    %c0_10 = arith.constant 0 : index
    %c0_11 = arith.constant 0 : index
    %c0_12 = arith.constant 0 : index
    %15 = vector.load %arg4[%c0_10, %c0_11, %c0_12] : memref<1x32x32xbf16, #tpu.memory_space<vmem>>, vector<1x32x32xbf16>
    %16 = vector.shape_cast %15 : vector<1x32x32xbf16> to vector<32x32xbf16>
    %cst_13 = arith.constant dense<0.000000e+00> : vector<8x32xf32>
    %17 = tpu.matmul %14, %16, %cst_13 {dimension_numbers = #tpu.dot_dimension_numbers<[1], [0], [0], [1], [0, 0, 1, 1], [], []>} : vector<8x32xbf16>, vector<32x32xbf16>, vector<8x32xf32> -> vector<8x32xf32>
    %c0_14 = arith.constant 0 : index
    %c0_15 = arith.constant 0 : index
    %c0_16 = arith.constant 0 : index
    %18 = vector.load %arg5[%c0_14, %c0_15, %c0_16] : memref<1x1x32xf32, #tpu.memory_space<vmem>>, vector<1x1x32xf32>
    %19 = vector.shape_cast %18 : vector<1x1x32xf32> to vector<1x32xf32>
    %20 = vector.broadcast %19 : vector<1x32xf32> to vector<8x32xf32>
    %21 = arith.addf %17, %20 : vector<8x32xf32>
    %cst_17 = arith.constant 0.000000e+00 : f32
    %22 = vector.broadcast %cst_17 : f32 to vector<8x32xf32>
    %23 = arith.maximumf %21, %22 : vector<8x32xf32>
    %c1 = arith.constant 1 : index
    %c0_18 = arith.constant 0 : index
    %c0_19 = arith.constant 0 : index
    %24 = vector.load %arg8[%c1, %c0_18, %c0_19] : memref<2x8x32xi32, #tpu.memory_space<vmem>>, vector<1x8x32xi32>
    %25 = vector.shape_cast %24 : vector<1x8x32xi32> to vector<8x32xi32>
    %c-2147483648_i32_20 = arith.constant -2147483648 : i32
    %26 = vector.broadcast %c-2147483648_i32_20 : i32 to vector<8x32xi32>
    %27 = arith.cmpi ult, %25, %26 : vector<8x32xi32>
    %cst_21 = arith.constant 0.000000e+00 : f32
    %28 = vector.broadcast %cst_21 : f32 to vector<8x32xf32>
    %29 = arith.select %27, %23, %28 : vector<8x32xi1>, vector<8x32xf32>
    %30 = arith.truncf %29 : vector<8x32xf32> to vector<8x32xbf16>
    %c0_22 = arith.constant 0 : index
    %c0_23 = arith.constant 0 : index
    %31 = vector.load %arg6[%c0_22, %c0_23] : memref<32x128xbf16, #tpu.memory_space<vmem>>, vector<32x128xbf16>
    %cst_24 = arith.constant dense<0.000000e+00> : vector<8x128xf32>
    %32 = tpu.matmul %30, %31, %cst_24 {dimension_numbers = #tpu.dot_dimension_numbers<[1], [0], [0], [1], [0, 0, 1, 1], [], []>} : vector<8x32xbf16>, vector<32x128xbf16>, vector<8x128xf32> -> vector<8x128xf32>
    %c0_25 = arith.constant 0 : index
    %c0_26 = arith.constant 0 : index
    %33 = vector.load %arg7[%c0_25, %c0_26] : memref<1x128xf32, #tpu.memory_space<vmem>>, vector<1x128xf32>
    %34 = vector.broadcast %33 : vector<1x128xf32> to vector<8x128xf32>
    %35 = arith.addf %32, %34 : vector<8x128xf32>
    %cst_27 = arith.constant dense<0xFF800000> : vector<8xf32>
    %36 = vector.multi_reduction <maximumf>, %35, %cst_27 [1] : vector<8x128xf32> to vector<8xf32>
    %37 = vector.shape_cast %36 : vector<8xf32> to vector<8x1xf32>
    %38 = vector.broadcast %37 : vector<8x1xf32> to vector<8x128xf32>
    %39 = arith.subf %35, %38 : vector<8x128xf32>
    %40 = math.exp %39 : vector<8x128xf32>
    %cst_28 = arith.constant dense<0.000000e+00> : vector<8xf32>
    %41 = vector.multi_reduction <add>, %40, %cst_28 [1] : vector<8x128xf32> to vector<8xf32>
    %42 = vector.shape_cast %41 : vector<8xf32> to vector<8x1xf32>
    %43 = math.log %42 : vector<8x1xf32>
    %44 = vector.broadcast %43 : vector<8x1xf32> to vector<8x128xf32>
    %45 = arith.subf %39, %44 : vector<8x128xf32>
    %c0_29 = arith.constant 0 : index
    %c0_30 = arith.constant 0 : index
    %46 = vector.load %arg9[%c0_29, %c0_30] : memref<8x128xf32, #tpu.memory_space<vmem>>, vector<8x128xf32>
    tpu.vector_store %arg9[%c0_29, %c0_30], %45 {strides = array<i32>} : memref<8x128xf32, #tpu.memory_space<vmem>>, vector<8x128xf32>,
    return
  }
  func.func @transform_0(%arg0: i32) -> (i32, i32) {
    %c0_i32 = arith.constant 0 : i32
    %c0_i32_0 = arith.constant 0 : i32
    return %arg0, %c0_i32 : i32, i32
  }
  func.func @transform_1(%arg0: i32) -> (i32, i32) {
    %c0_i32 = arith.constant 0 : i32
    %c0_i32_0 = arith.constant 0 : i32
    %c0_i32_1 = arith.constant 0 : i32
    return %c0_i32, %c0_i32_0 : i32, i32
  }
  func.func @transform_2(%arg0: i32) -> (i32, i32) {
    %c0_i32 = arith.constant 0 : i32
    %c0_i32_0 = arith.constant 0 : i32
    %c0_i32_1 = arith.constant 0 : i32
    return %c0_i32, %c0_i32_0 : i32, i32
  }
  func.func @transform_3(%arg0: i32) -> (i32, i32, i32) {
    %c0_i32 = arith.constant 0 : i32
    %c0_i32_0 = arith.constant 0 : i32
    %c0_i32_1 = arith.constant 0 : i32
    %c0_i32_2 = arith.constant 0 : i32
    return %c0_i32, %c0_i32_0, %c0_i32_1 : i32, i32, i32
  }
  func.func @transform_4(%arg0: i32) -> (i32, i32, i32) {
    %c0_i32 = arith.constant 0 : i32
    %c0_i32_0 = arith.constant 0 : i32
    %c0_i32_1 = arith.constant 0 : i32
    %c0_i32_2 = arith.constant 0 : i32
    return %c0_i32, %c0_i32_0, %c0_i32_1 : i32, i32, i32
  }
  func.func @transform_5(%arg0: i32) -> (i32, i32) {
    %c0_i32 = arith.constant 0 : i32
    %c0_i32_0 = arith.constant 0 : i32
    %c0_i32_1 = arith.constant 0 : i32
    return %c0_i32, %c0_i32_0 : i32, i32
  }
  func.func @transform_6(%arg0: i32) -> (i32, i32) {
    %c0_i32 = arith.constant 0 : i32
    %c0_i32_0 = arith.constant 0 : i32
    %c0_i32_1 = arith.constant 0 : i32
    return %c0_i32, %c0_i32_0 : i32, i32
  }
  func.func @transform_7(%arg0: i32) -> (i32, i32, i32) {
    %c0_i32 = arith.constant 0 : i32
    %c0_i32_0 = arith.constant 0 : i32
    %c0_i32_1 = arith.constant 0 : i32
    return %c0_i32, %arg0, %c0_i32_0 : i32, i32, i32
  }
  func.func @transform_8(%arg0: i32) -> (i32, i32) {
    %c0_i32 = arith.constant 0 : i32
    %c0_i32_0 = arith.constant 0 : i32
    return %arg0, %c0_i32 : i32, i32
  }
}

</mosaic_0001>

<llo_original>
// kernel: tpu_custom_call.1
$region0: #{tpu_custom_call.1}
  #allocation0 [shape = 'u32[]', space=smem, size = 0x4, offset = 0x4, fixed_abs, tag = 'smem constant byte address 0x4 - core index']
  #allocation1 [shape = 'u32[144,128]{1,0:T(1,128)}', space=vmem, size = 0x12000, scoped, tag = 'internal scratch']
  %s0 = inlined_call_operand.vmem [shape: bf16[8,784], index: 0, kind: input, shape index: {}]
  %s1 = inlined_call_operand.vmem [shape: bf16[784,32], index: 1, kind: input, shape index: {}]
  %s2 = inlined_call_operand.vmem [shape: f32[1,32], index: 2, kind: input, shape index: {}]
  %s3 = inlined_call_operand.vmem [shape: bf16[1,32,32], index: 3, kind: input, shape index: {}]
  %s4 = inlined_call_operand.vmem [shape: f32[1,1,32], index: 4, kind: input, shape index: {}]
  %s5 = inlined_call_operand.vmem [shape: bf16[32,128], index: 5, kind: input, shape index: {}]
  %s6 = inlined_call_operand.vmem [shape: f32[1,128], index: 6, kind: input, shape index: {}]
  %s7 = inlined_call_operand.vmem [shape: u32[2,8,32], index: 7, kind: input, shape index: {}]
  %s8 = inlined_call_operand.hbm [shape: f32[8,128], index: 8, kind: output, shape index: {}]
  %s9 = sld [smem:[#allocation0]]
  $region42: #{tpu_custom_call.1} parent=0
    _
  %s11 = ssub.s32 1, %s9
  %s12 = scalar_select 0, %s11, %s9
  $region1: #{tpu_custom_call.1} parent=0
    #allocation2 [shape = 'u8[4096]{0}', space=vmem, size = 0x1000, scoped, tag = 'output window, operand 0, single buffered']
    #allocation3 [shape = 's32[1]{0}', space=sflag, size = 0x4, scoped, tag = 'scoped memory for tpu_custom_call.1']
    %13 = vsyncpa [#allocation3], 0
    // Predicated region
    $region2: #{tpu_custom_call.1} parent=1 // pred_check
      _
    $region3: #{tpu_custom_call.1} parent=1 // pred_check_branch
      %15 = sbr.rel (0) target = $region5
    $region4: #{tpu_custom_call.1} parent=1 // pred_region
      _
    $region5: #{tpu_custom_call.1} parent=1 // pred_fallthru
      _
    // Predicated region
    $region6: #{tpu_custom_call.1} parent=1 // pred_check
      _
    $region7: #{tpu_custom_call.1} parent=1 // pred_check_branch
      %17 = sbr.rel (0) target = $region9
    $region8: #{tpu_custom_call.1} parent=1 // pred_region
      _
    $region9: #{tpu_custom_call.1} parent=1 // pred_fallthru
      _
    // Predicated region
    $region10: #{tpu_custom_call.1} parent=1 // pred_check
      _
    $region11: #{tpu_custom_call.1} parent=1 // pred_check_branch
      %19 = sbr.rel (0) target = $region13
    $region12: #{tpu_custom_call.1} parent=1 // pred_region
      _
    $region13: #{tpu_custom_call.1} parent=1 // pred_fallthru
      _
    // Predicated region
    $region14: #{tpu_custom_call.1} parent=1 // pred_check
      _
    $region15: #{tpu_custom_call.1} parent=1 // pred_check_branch
      %21 = sbr.rel (0) target = $region17
    $region16: #{tpu_custom_call.1} parent=1 // pred_region
      _
    $region17: #{tpu_custom_call.1} parent=1 // pred_fallthru
      _
    // Predicated region
    $region18: #{tpu_custom_call.1} parent=1 // pred_check
      _
    $region19: #{tpu_custom_call.1} parent=1 // pred_check_branch
      %23 = sbr.rel (0) target = $region21
    $region20: #{tpu_custom_call.1} parent=1 // pred_region
      _
    $region21: #{tpu_custom_call.1} parent=1 // pred_fallthru
      _
    // Predicated region
    $region22: #{tpu_custom_call.1} parent=1 // pred_check
      _
    $region23: #{tpu_custom_call.1} parent=1 // pred_check_branch
      %25 = sbr.rel (0) target = $region25
    $region24: #{tpu_custom_call.1} parent=1 // pred_region
      _
    $region25: #{tpu_custom_call.1} parent=1 // pred_fallthru
      _
    // Predicated region
    $region26: #{tpu_custom_call.1} parent=1 // pred_check
      _
    $region27: #{tpu_custom_call.1} parent=1 // pred_check_branch
      %27 = sbr.rel (0) target = $region29
    $region28: #{tpu_custom_call.1} parent=1 // pred_region
      _
    $region29: #{tpu_custom_call.1} parent=1 // pred_fallthru
      _
    // Predicated region
    $region30: #{tpu_custom_call.1} parent=1 // pred_check
      _
    $region31: #{tpu_custom_call.1} parent=1 // pred_check_branch
      %29 = sbr.rel (0) target = $region33
    $region32: #{tpu_custom_call.1} parent=1 // pred_region
      _
    $region33: #{tpu_custom_call.1} parent=1 // pred_fallthru
      _
    %v31 = vld [vmem:[%s0] sm:$0xff]
    %v32 = vld [vmem:[%s0 + $0x8] sm:$0xff]
    %v33 = vld [vmem:[%s0 + $0x10] sm:$0xff]
    %v34 = vld [vmem:[%s0 + $0x18] sm:$0xf]
    %v35 = vld [vmem:[%s1] sm:$0xf]
    %v36 = vld [vmem:[%s1 + $0x4] sm:$0xf]
    %v37 = vld [vmem:[%s1 + $0x8] sm:$0xf]
    %v38 = vld [vmem:[%s1 + $0xc] sm:$0xf]
    %v39 = vld [vmem:[%s1 + $0x10] sm:$0xf]
    %v40 = vld [vmem:[%s1 + $0x14] sm:$0xf]
    %v41 = vld [vmem:[%s1 + $0x18] sm:$0xf]
    %v42 = vld [vmem:[%s1 + $0x1c] sm:$0xf]
    %v43 = vld [vmem:[%s1 + $0x20] sm:$0xf]
    %v44 = vld [vmem:[%s1 + $0x24] sm:$0xf]
    %v45 = vld [vmem:[%s1 + $0x28] sm:$0xf]
    %v46 = vld [vmem:[%s1 + $0x2c] sm:$0xf]
    %v47 = vld [vmem:[%s1 + $0x30] sm:$0xf]
    %v48 = vld [vmem:[%s1 + $0x34] sm:$0xf]
    %v49 = vld [vmem:[%s1 + $0x38] sm:$0xf]
    %v50 = vld [vmem:[%s1 + $0x3c] sm:$0xf]
    %v51 = vld [vmem:[%s1 + $0x40] sm:$0xf]
    %v52 = vld [vmem:[%s1 + $0x44] sm:$0xf]
    %v53 = vld [vmem:[%s1 + $0x48] sm:$0xf]
    %v54 = vld [vmem:[%s1 + $0x4c] sm:$0xf]
    %v55 = vld [vmem:[%s1 + $0x50] sm:$0xf]
    %v56 = vld [vmem:[%s1 + $0x54] sm:$0xf]
    %v57 = vld [vmem:[%s1 + $0x58] sm:$0xf]
    %v58 = vld [vmem:[%s1 + $0x5c] sm:$0xf]
    %v59 = vld [vmem:[%s1 + $0x60] sm:$0xf]
    %v60 = vld [vmem:[%s1 + $0x64] sm:$0xf]
    %v61 = vld [vmem:[%s1 + $0x68] sm:$0xf]
    %v62 = vld [vmem:[%s1 + $0x6c] sm:$0xf]
    %v63 = vld [vmem:[%s1 + $0x70] sm:$0xf]
    %v64 = vld [vmem:[%s1 + $0x74] sm:$0xf]
    %v65 = vld [vmem:[%s1 + $0x78] sm:$0xf]
    %v66 = vld [vmem:[%s1 + $0x7c] sm:$0xf]
    %v67 = vld [vmem:[%s1 + $0x80] sm:$0xf]
    %v68 = vld [vmem:[%s1 + $0x84] sm:$0xf]
    %v69 = vld [vmem:[%s1 + $0x88] sm:$0xf]
    %v70 = vld [vmem:[%s1 + $0x8c] sm:$0xf]
    %v71 = vld [vmem:[%s1 + $0x90] sm:$0xf]
    %v72 = vld [vmem:[%s1 + $0x94] sm:$0xf]
    %v73 = vld [vmem:[%s1 + $0x98] sm:$0xf]
    %v74 = vld [vmem:[%s1 + $0x9c] sm:$0xf]
    %v75 = vld [vmem:[%s1 + $0xa0] sm:$0xf]
    %v76 = vld [vmem:[%s1 + $0xa4] sm:$0xf]
    %v77 = vld [vmem:[%s1 + $0xa8] sm:$0xf]
    %v78 = vld [vmem:[%s1 + $0xac] sm:$0xf]
    %v79 = vld [vmem:[%s1 + $0xb0] sm:$0xf]
    %v80 = vld [vmem:[%s1 + $0xb4] sm:$0xf]
    %v81 = vld [vmem:[%s1 + $0xb8] sm:$0xf]
    %v82 = vld [vmem:[%s1 + $0xbc] sm:$0xf]
    %v83 = vld [vmem:[%s1 + $0xc0] sm:$0xf]
    %v84 = vld [vmem:[%s1 + $0xc4] sm:$0xf]
    %v85 = vld [vmem:[%s1 + $0xc8] sm:$0xf]
    %v86 = vld [vmem:[%s1 + $0xcc] sm:$0xf]
    %v87 = vld [vmem:[%s1 + $0xd0] sm:$0xf]
    %v88 = vld [vmem:[%s1 + $0xd4] sm:$0xf]
    %v89 = vld [vmem:[%s1 + $0xd8] sm:$0xf]
    %v90 = vld [vmem:[%s1 + $0xdc] sm:$0xf]
    %v91 = vld [vmem:[%s1 + $0xe0] sm:$0xf]
    %v92 = vld [vmem:[%s1 + $0xe4] sm:$0xf]
    %v93 = vld [vmem:[%s1 + $0xe8] sm:$0xf]
    %v94 = vld [vmem:[%s1 + $0xec] sm:$0xf]
    %v95 = vld [vmem:[%s1 + $0xf0] sm:$0xf]
    %v96 = vld [vmem:[%s1 + $0xf4] sm:$0xf]
    %v97 = vld [vmem:[%s1 + $0xf8] sm:$0xf]
    %v98 = vld [vmem:[%s1 + $0xfc] sm:$0xf]
    %v99 = vld [vmem:[%s1 + $0x100] sm:$0xf]
    %v100 = vld [vmem:[%s1 + $0x104] sm:$0xf]
    %v101 = vld [vmem:[%s1 + $0x108] sm:$0xf]
    %v102 = vld [vmem:[%s1 + $0x10c] sm:$0xf]
    %v103 = vld [vmem:[%s1 + $0x110] sm:$0xf]
    %v104 = vld [vmem:[%s1 + $0x114] sm:$0xf]
    %v105 = vld [vmem:[%s1 + $0x118] sm:$0xf]
    %v106 = vld [vmem:[%s1 + $0x11c] sm:$0xf]
    %v107 = vld [vmem:[%s1 + $0x120] sm:$0xf]
    %v108 = vld [vmem:[%s1 + $0x124] sm:$0xf]
    %v109 = vld [vmem:[%s1 + $0x128] sm:$0xf]
    %v110 = vld [vmem:[%s1 + $0x12c] sm:$0xf]
    %v111 = vld [vmem:[%s1 + $0x130] sm:$0xf]
    %v112 = vld [vmem:[%s1 + $0x134] sm:$0xf]
    %v113 = vld [vmem:[%s1 + $0x138] sm:$0xf]
    %v114 = vld [vmem:[%s1 + $0x13c] sm:$0xf]
    %v115 = vld [vmem:[%s1 + $0x140] sm:$0xf]
    %v116 = vld [vmem:[%s1 + $0x144] sm:$0xf]
    %v117 = vld [vmem:[%s1 + $0x148] sm:$0xf]
    %v118 = vld [vmem:[%s1 + $0x14c] sm:$0xf]
    %v119 = vld [vmem:[%s1 + $0x150] sm:$0xf]
    %v120 = vld [vmem:[%s1 + $0x154] sm:$0xf]
    %v121 = vld [vmem:[%s1 + $0x158] sm:$0xf]
    %v122 = vld [vmem:[%s1 + $0x15c] sm:$0xf]
    %v123 = vld [vmem:[%s1 + $0x160] sm:$0xf]
    %v124 = vld [vmem:[%s1 + $0x164] sm:$0xf]
    %v125 = vld [vmem:[%s1 + $0x168] sm:$0xf]
    %v126 = vld [vmem:[%s1 + $0x16c] sm:$0xf]
    %v127 = vld [vmem:[%s1 + $0x170] sm:$0xf]
    %v128 = vld [vmem:[%s1 + $0x174] sm:$0xf]
    %v129 = vld [vmem:[%s1 + $0x178] sm:$0xf]
    %v130 = vld [vmem:[%s1 + $0x17c] sm:$0xf]
    %v131 = vld [vmem:[%s1 + $0x180] sm:$0xf]
    %v132 = vld [vmem:[%s1 + $0x184] sm:$0xf]
    %v133 = vld [vmem:[%s2] sm:$0x1]
    %v135 = vlaneseq
    %v136 = vshrl.u32 %v135, 7
    %v137 = vsub.s32 0, %v136
    %v138 = vrot.slane %v133, %v137
    %v144 = vunpack.c.l.b16 %v31
    %v145 = vunpack.c.h.b16 %v31
    %v146 = vunpack.c.l.b16 %v32
    %v147 = vunpack.c.h.b16 %v32
    %v148 = vunpack.c.l.b16 %v33
    %v149 = vunpack.c.h.b16 %v33
    %v150 = vunpack.c.l.b16 %v34
    %v151 = vpack.c.b16 %v144, %v144
    %v152 = vpack.c.b16 %v145, %v145
    %v153 = vpack.c.b16 %v146, %v146
    %v154 = vpack.c.b16 %v147, %v147
    %v155 = vpack.c.b16 %v148, %v148
    %v156 = vpack.c.b16 %v149, %v149
    %v157 = vpack.c.b16 %v150, %v150
    %v262 = vunpack.c.l.b16 %v35
    %v263 = vunpack.c.l.b16 %v36
    %v264 = vunpack.c.l.b16 %v37
    %v265 = vunpack.c.l.b16 %v38
    %v266 = vunpack.c.l.b16 %v39
    %v267 = vunpack.c.l.b16 %v40
    %v268 = vunpack.c.l.b16 %v41
    %v269 = vunpack.c.l.b16 %v42
    %v270 = vunpack.c.l.b16 %v43
    %v271 = vunpack.c.l.b16 %v44
    %v272 = vunpack.c.l.b16 %v45
    %v273 = vunpack.c.l.b16 %v46
    %v274 = vunpack.c.l.b16 %v47
    %v275 = vunpack.c.l.b16 %v48
    %v276 = vunpack.c.l.b16 %v49
    %v277 = vunpack.c.l.b16 %v50
    %v278 = vunpack.c.l.b16 %v51
    %v279 = vunpack.c.l.b16 %v52
    %v280 = vunpack.c.l.b16 %v53
    %v281 = vunpack.c.l.b16 %v54
    %v282 = vunpack.c.l.b16 %v55
    %v283 = vunpack.c.l.b16 %v56
    %v284 = vunpack.c.l.b16 %v57
    %v285 = vunpack.c.l.b16 %v58
    %v286 = vunpack.c.l.b16 %v59
    %v287 = vunpack.c.l.b16 %v60
    %v288 = vunpack.c.l.b16 %v61
    %v289 = vunpack.c.l.b16 %v62
    %v290 = vunpack.c.l.b16 %v63
    %v291 = vunpack.c.l.b16 %v64
    %v292 = vunpack.c.l.b16 %v65
    %v293 = vunpack.c.l.b16 %v66
    %v294 = vunpack.c.l.b16 %v67
    %v295 = vunpack.c.l.b16 %v68
    %v296 = vunpack.c.l.b16 %v69
    %v297 = vunpack.c.l.b16 %v70
    %v298 = vunpack.c.l.b16 %v71
    %v299 = vunpack.c.l.b16 %v72
    %v300 = vunpack.c.l.b16 %v73
    %v301 = vunpack.c.l.b16 %v74
    %v302 = vunpack.c.l.b16 %v75
    %v303 = vunpack.c.l.b16 %v76
    %v304 = vunpack.c.l.b16 %v77
    %v305 = vunpack.c.l.b16 %v78
    %v306 = vunpack.c.l.b16 %v79
    %v307 = vunpack.c.l.b16 %v80
    %v308 = vunpack.c.l.b16 %v81
    %v309 = vunpack.c.l.b16 %v82
    %v310 = vunpack.c.l.b16 %v83
    %v311 = vunpack.c.l.b16 %v84
    %v312 = vunpack.c.l.b16 %v85
    %v313 = vunpack.c.l.b16 %v86
    %v314 = vunpack.c.l.b16 %v87
    %v315 = vunpack.c.l.b16 %v88
    %v316 = vunpack.c.l.b16 %v89
    %v317 = vunpack.c.l.b16 %v90
    %v318 = vunpack.c.l.b16 %v91
    %v319 = vunpack.c.l.b16 %v92
    %v320 = vunpack.c.l.b16 %v93
    %v321 = vunpack.c.l.b16 %v94
    %v322 = vunpack.c.l.b16 %v95
    %v323 = vunpack.c.l.b16 %v96
    %v324 = vunpack.c.l.b16 %v97
    %v325 = vunpack.c.l.b16 %v98
    %v326 = vunpack.c.l.b16 %v99
    %v327 = vunpack.c.l.b16 %v100
    %v328 = vunpack.c.l.b16 %v101
    %v329 = vunpack.c.l.b16 %v102
    %v330 = vunpack.c.l.b16 %v103
    %v331 = vunpack.c.l.b16 %v104
    %v332 = vunpack.c.l.b16 %v105
    %v333 = vunpack.c.l.b16 %v106
    %v334 = vunpack.c.l.b16 %v107
    %v335 = vunpack.c.l.b16 %v108
    %v336 = vunpack.c.l.b16 %v109
    %v337 = vunpack.c.l.b16 %v110
    %v338 = vunpack.c.l.b16 %v111
    %v339 = vunpack.c.l.b16 %v112
    %v340 = vunpack.c.l.b16 %v113
    %v341 = vunpack.c.l.b16 %v114
    %v342 = vunpack.c.l.b16 %v115
    %v343 = vunpack.c.l.b16 %v116
    %v344 = vunpack.c.l.b16 %v117
    %v345 = vunpack.c.l.b16 %v118
    %v346 = vunpack.c.l.b16 %v119
    %v347 = vunpack.c.l.b16 %v120
    %v348 = vunpack.c.l.b16 %v121
    %v349 = vunpack.c.l.b16 %v122
    %v350 = vunpack.c.l.b16 %v123
    %v351 = vunpack.c.l.b16 %v124
    %v352 = vunpack.c.l.b16 %v125
    %v353 = vunpack.c.l.b16 %v126
    %v354 = vunpack.c.l.b16 %v127
    %v355 = vunpack.c.l.b16 %v128
    %v356 = vunpack.c.l.b16 %v129
    %v357 = vunpack.c.l.b16 %v130
    %v358 = vunpack.c.l.b16 %v131
    %v359 = vunpack.c.l.b16 %v132
    %v360 = vpack.c.b16 %v263, %v262
    %v361 = vpack.c.b16 %v265, %v264
    %v362 = vpack.c.b16 %v267, %v266
    %v363 = vpack.c.b16 %v269, %v268
    %v364 = vpack.c.b16 %v271, %v270
    %v365 = vpack.c.b16 %v273, %v272
    %v366 = vpack.c.b16 %v275, %v274
    %v367 = vpack.c.b16 %v277, %v276
    %v368 = vpack.c.b16 %v279, %v278
    %v369 = vpack.c.b16 %v281, %v280
    %v370 = vpack.c.b16 %v283, %v282
    %v371 = vpack.c.b16 %v285, %v284
    %v372 = vpack.c.b16 %v287, %v286
    %v373 = vpack.c.b16 %v289, %v288
    %v374 = vpack.c.b16 %v291, %v290
    %v375 = vpack.c.b16 %v293, %v292
    %v376 = vpack.c.b16 %v295, %v294
    %v377 = vpack.c.b16 %v297, %v296
    %v378 = vpack.c.b16 %v299, %v298
    %v379 = vpack.c.b16 %v301, %v300
    %v380 = vpack.c.b16 %v303, %v302
    %v381 = vpack.c.b16 %v305, %v304
    %v382 = vpack.c.b16 %v307, %v306
    %v383 = vpack.c.b16 %v309, %v308
    %v384 = vpack.c.b16 %v311, %v310
    %v385 = vpack.c.b16 %v313, %v312
    %v386 = vpack.c.b16 %v315, %v314
    %v387 = vpack.c.b16 %v317, %v316
    %v388 = vpack.c.b16 %v319, %v318
    %v389 = vpack.c.b16 %v321, %v320
    %v390 = vpack.c.b16 %v323, %v322
    %v391 = vpack.c.b16 %v325, %v324
    %v392 = vpack.c.b16 %v327, %v326
    %v393 = vpack.c.b16 %v329, %v328
    %v394 = vpack.c.b16 %v331, %v330
    %v395 = vpack.c.b16 %v333, %v332
    %v396 = vpack.c.b16 %v335, %v334
    %v397 = vpack.c.b16 %v337, %v336
    %v398 = vpack.c.b16 %v339, %v338
    %v399 = vpack.c.b16 %v341, %v340
    %v400 = vpack.c.b16 %v343, %v342
    %v401 = vpack.c.b16 %v345, %v344
    %v402 = vpack.c.b16 %v347, %v346
    %v403 = vpack.c.b16 %v349, %v348
    %v404 = vpack.c.b16 %v351, %v350
    %v405 = vpack.c.b16 %v353, %v352
    %v406 = vpack.c.b16 %v355, %v354
    %v407 = vpack.c.b16 %v357, %v356
    %v408 = vpack.c.b16 %v359, %v358
    %vm458 = vcmask 130048
    %v460 = vsel %vm458, %v157, 0
    %462 = vmatprep.subr.bf16.mxu0 0
    %463 = vmatpush1.bf16.msra.mxu0 %v367
    %464 = vmatprep.subr.bf16.mxu0 0
    %465 = vmatpush1.bf16.msra.mxu0 %v366
    %466 = vmatprep.subr.bf16.mxu0 0
    %467 = vmatpush1.bf16.msra.mxu0 %v365
    %468 = vmatprep.subr.bf16.mxu0 0
    %469 = vmatpush1.bf16.msra.mxu0 %v364
    %470 = vmatprep.subr.bf16.mxu0 0
    %471 = vmatpush1.bf16.msra.mxu0 %v363
    %472 = vmatprep.subr.bf16.mxu0 0
    %473 = vmatpush1.bf16.msra.mxu0 %v362
    %474 = vmatprep.subr.bf16.mxu0 0
    %475 = vmatpush1.bf16.msra.mxu0 %v361
    %476 = vmatprep.subr.bf16.mxu0 0
    %477 = vmatpush1.bf16.msra.mxu0 %v360
    %478 = vmatprep.subr.bf16.mxu0 0
    %479 = vmatpush2.bf16.msra.mxu0 %v375
    %480 = vmatprep.subr.bf16.mxu0 0
    %481 = vmatpush2.bf16.msra.mxu0 %v374
    %482 = vmatprep.subr.bf16.mxu0 0
    %483 = vmatpush2.bf16.msra.mxu0 %v373
    %484 = vmatprep.subr.bf16.mxu0 0
    %485 = vmatpush2.bf16.msra.mxu0 %v372
    %486 = vmatprep.subr.bf16.mxu0 0
    %487 = vmatpush2.bf16.msra.mxu0 %v371
    %488 = vmatprep.subr.bf16.mxu0 0
    %489 = vmatpush2.bf16.msra.mxu0 %v370
    %490 = vmatprep.subr.bf16.mxu0 0
    %491 = vmatpush2.bf16.msra.mxu0 %v369
    %492 = vmatprep.subr.bf16.mxu0 0
    %493 = vmatpush2.bf16.msra.mxu0 %v368
    %494 = vmatprep.mubr.bf16.mxu0 %v152
    %495 = vmatmul.mubr.bf16.gmra.mxu0 %v151
    %v496 = vpop.f32.mrf.mxu0
    %v497 = vadd.f32 %v138, %v496
    %v498 = vpop.f32.mrf.mxu0
    %v499 = vpop.f32.mrf.mxu0
    %v500 = vpop.f32.mrf.mxu0
    %501 = vdwg.mxu0
    %502 = vmatprep.subr.bf16.mxu0 0
    %503 = vmatpush1.bf16.msra.mxu0 %v383
    %504 = vmatprep.subr.bf16.mxu0 0
    %505 = vmatpush1.bf16.msra.mxu0 %v382
    %506 = vmatprep.subr.bf16.mxu0 0
    %507 = vmatpush1.bf16.msra.mxu0 %v381
    %508 = vmatprep.subr.bf16.mxu0 0
    %509 = vmatpush1.bf16.msra.mxu0 %v380
    %510 = vmatprep.subr.bf16.mxu0 0
    %511 = vmatpush1.bf16.msra.mxu0 %v379
    %512 = vmatprep.subr.bf16.mxu0 0
    %513 = vmatpush1.bf16.msra.mxu0 %v378
    %514 = vmatprep.subr.bf16.mxu0 0
    %515 = vmatpush1.bf16.msra.mxu0 %v377
    %516 = vmatprep.subr.bf16.mxu0 0
    %517 = vmatpush1.bf16.msra.mxu0 %v376
    %518 = vmatprep.subr.bf16.mxu0 0
    %519 = vmatpush2.bf16.msra.mxu0 %v391
    %520 = vmatprep.subr.bf16.mxu0 0
    %521 = vmatpush2.bf16.msra.mxu0 %v390
    %522 = vmatprep.subr.bf16.mxu0 0
    %523 = vmatpush2.bf16.msra.mxu0 %v389
    %524 = vmatprep.subr.bf16.mxu0 0
    %525 = vmatpush2.bf16.msra.mxu0 %v388
    %526 = vmatprep.subr.bf16.mxu0 0
    %527 = vmatpush2.bf16.msra.mxu0 %v387
    %528 = vmatprep.subr.bf16.mxu0 0
    %529 = vmatpush2.bf16.msra.mxu0 %v386
    %530 = vmatprep.subr.bf16.mxu0 0
    %531 = vmatpush2.bf16.msra.mxu0 %v385
    %532 = vmatprep.subr.bf16.mxu0 0
    %533 = vmatpush2.bf16.msra.mxu0 %v384
    %534 = vmatprep.mubr.bf16.mxu0 %v154
    %535 = vmatmul.mubr.bf16.gmra.mxu0 %v153
    %v536 = vpop.f32.mrf.mxu0
    %v537 = vadd.f32 %v497, %v536
    %v538 = vpop.f32.mrf.mxu0
    %v539 = vpop.f32.mrf.mxu0
    %v540 = vpop.f32.mrf.mxu0
    %541 = vdwg.mxu0
    %542 = vmatprep.subr.bf16.mxu0 0
    %543 = vmatpush1.bf16.msra.mxu0 %v399
    %544 = vmatprep.subr.bf16.mxu0 0
    %545 = vmatpush1.bf16.msra.mxu0 %v398
    %546 = vmatprep.subr.bf16.mxu0 0
    %547 = vmatpush1.bf16.msra.mxu0 %v397
    %548 = vmatprep.subr.bf16.mxu0 0
    %549 = vmatpush1.bf16.msra.mxu0 %v396
    %550 = vmatprep.subr.bf16.mxu0 0
    %551 = vmatpush1.bf16.msra.mxu0 %v395
    %552 = vmatprep.subr.bf16.mxu0 0
    %553 = vmatpush1.bf16.msra.mxu0 %v394
    %554 = vmatprep.subr.bf16.mxu0 0
    %555 = vmatpush1.bf16.msra.mxu0 %v393
    %556 = vmatprep.subr.bf16.mxu0 0
    %557 = vmatpush1.bf16.msra.mxu0 %v392
    %558 = vmatprep.subr.bf16.mxu0 0
    %559 = vmatpush2.bf16.msra.mxu0 %v407
    %560 = vmatprep.subr.bf16.mxu0 0
    %561 = vmatpush2.bf16.msra.mxu0 %v406
    %562 = vmatprep.subr.bf16.mxu0 0
    %563 = vmatpush2.bf16.msra.mxu0 %v405
    %564 = vmatprep.subr.bf16.mxu0 0
    %565 = vmatpush2.bf16.msra.mxu0 %v404
    %566 = vmatprep.subr.bf16.mxu0 0
    %567 = vmatpush2.bf16.msra.mxu0 %v403
    %568 = vmatprep.subr.bf16.mxu0 0
    %569 = vmatpush2.bf16.msra.mxu0 %v402
    %570 = vmatprep.subr.bf16.mxu0 0
    %571 = vmatpush2.bf16.msra.mxu0 %v401
    %572 = vmatprep.subr.bf16.mxu0 0
    %573 = vmatpush2.bf16.msra.mxu0 %v400
    %574 = vmatprep.mubr.bf16.mxu0 %v156
    %575 = vmatmul.mubr.bf16.gmra.mxu0 %v155
    %v576 = vpop.f32.mrf.mxu0
    %v577 = vadd.f32 %v537, %v576
    %v578 = vpop.f32.mrf.mxu0
    %v579 = vpop.f32.mrf.mxu0
    %v580 = vpop.f32.mrf.mxu0
    %581 = vdwg.mxu0
    %582 = vmatprep.subr.bf16.mxu0 0
    %583 = vmatpush1.bf16.msra.mxu0 0
    %584 = vmatprep.subr.bf16.mxu0 0
    %585 = vmatpush1.bf16.msra.mxu0 0
    %586 = vmatprep.subr.bf16.mxu0 0
    %587 = vmatpush1.bf16.msra.mxu0 0
    %588 = vmatprep.subr.bf16.mxu0 0
    %589 = vmatpush1.bf16.msra.mxu0 0
    %590 = vmatprep.subr.bf16.mxu0 0
    %591 = vmatpush1.bf16.msra.mxu0 0
    %592 = vmatprep.subr.bf16.mxu0 0
    %593 = vmatpush1.bf16.msra.mxu0 0
    %594 = vmatprep.subr.bf16.mxu0 0
    %595 = vmatpush1.bf16.msra.mxu0 0
    %596 = vmatprep.subr.bf16.mxu0 0
    %597 = vmatpush1.bf16.msra.mxu0 %v408
    %598 = vmatprep.subr.bf16.mxu0 0
    %599 = vmatpush2.bf16.msra.mxu0 0
    %600 = vmatprep.subr.bf16.mxu0 0
    %601 = vmatpush2.bf16.msra.mxu0 0
    %602 = vmatprep.subr.bf16.mxu0 0
    %603 = vmatpush2.bf16.msra.mxu0 0
    %604 = vmatprep.subr.bf16.mxu0 0
    %605 = vmatpush2.bf16.msra.mxu0 0
    %606 = vmatprep.subr.bf16.mxu0 0
    %607 = vmatpush2.bf16.msra.mxu0 0
    %608 = vmatprep.subr.bf16.mxu0 0
    %609 = vmatpush2.bf16.msra.mxu0 0
    %610 = vmatprep.subr.bf16.mxu0 0
    %611 = vmatpush2.bf16.msra.mxu0 0
    %612 = vmatprep.subr.bf16.mxu0 0
    %613 = vmatpush2.bf16.msra.mxu0 0
    %614 = vmatprep.mubr.bf16.mxu0 0
    %615 = vmatmul.mubr.bf16.gmra.mxu0 %v460
    %v616 = vpop.f32.mrf.mxu0
    %v617 = vadd.f32 %v577, %v616
    %v618 = vpop.f32.mrf.mxu0
    %v619 = vpop.f32.mrf.mxu0
    %v620 = vpop.f32.mrf.mxu0
    %621 = vdwg.mxu0
    %v622 = vmax.f32 %v617, 0.0
    %v623 = vld [vmem:[%s7] sm:$0xff]
    %vm624 = vcmp.lt.u32.totalorder %v623, 2147483648
    %v625 = vsel %vm624, %v622, 0.0
    %v626 = vpack.c.bf16 %v625, %v625
    %v627 = vld [vmem:[%s3] sm:$0xf]
    %v628 = vld [vmem:[%s3 + $0x4] sm:$0xf]
    %v629 = vld [vmem:[%s3 + $0x8] sm:$0xf]
    %v630 = vld [vmem:[%s3 + $0xc] sm:$0xf]
    %v631 = vld [vmem:[%s4] sm:$0x1]
    %v633 = vlaneseq
    %v634 = vshrl.u32 %v633, 7
    %v635 = vsub.s32 0, %v634
    %v636 = vrot.slane %v631, %v635
    %v642 = vunpack.c.l.b16 %v627
    %v643 = vunpack.c.l.b16 %v628
    %v644 = vunpack.c.l.b16 %v629
    %v645 = vunpack.c.l.b16 %v630
    %v646 = vpack.c.b16 %v643, %v642
    %v647 = vpack.c.b16 %v645, %v644
    %vm650 = vcmask 261120
    %v652 = vsel %vm650, %v626, 0
    %654 = vmatprep.subr.bf16.mxu0 0
    %655 = vmatpush1.bf16.msra.mxu0 0
    %656 = vmatprep.subr.bf16.mxu0 0
    %657 = vmatpush1.bf16.msra.mxu0 0
    %658 = vmatprep.subr.bf16.mxu0 0
    %659 = vmatpush1.bf16.msra.mxu0 0
    %660 = vmatprep.subr.bf16.mxu0 0
    %661 = vmatpush1.bf16.msra.mxu0 0
    %662 = vmatprep.subr.bf16.mxu0 0
    %663 = vmatpush1.bf16.msra.mxu0 0
    %664 = vmatprep.subr.bf16.mxu0 0
    %665 = vmatpush1.bf16.msra.mxu0 0
    %666 = vmatprep.subr.bf16.mxu0 0
    %667 = vmatpush1.bf16.msra.mxu0 %v647
    %668 = vmatprep.subr.bf16.mxu0 0
    %669 = vmatpush1.bf16.msra.mxu0 %v646
    %670 = vmatprep.subr.bf16.mxu0 0
    %671 = vmatpush2.bf16.msra.mxu0 0
    %672 = vmatprep.subr.bf16.mxu0 0
    %673 = vmatpush2.bf16.msra.mxu0 0
    %674 = vmatprep.subr.bf16.mxu0 0
    %675 = vmatpush2.bf16.msra.mxu0 0
    %676 = vmatprep.subr.bf16.mxu0 0
    %677 = vmatpush2.bf16.msra.mxu0 0
    %678 = vmatprep.subr.bf16.mxu0 0
    %679 = vmatpush2.bf16.msra.mxu0 0
    %680 = vmatprep.subr.bf16.mxu0 0
    %681 = vmatpush2.bf16.msra.mxu0 0
    %682 = vmatprep.subr.bf16.mxu0 0
    %683 = vmatpush2.bf16.msra.mxu0 0
    %684 = vmatprep.subr.bf16.mxu0 0
    %685 = vmatpush2.bf16.msra.mxu0 0
    %686 = vmatprep.mubr.bf16.mxu0 0
    %687 = vmatmul.mubr.bf16.gmra.mxu0 %v652
    %v688 = vpop.f32.mrf.mxu0
    %v689 = vadd.f32 %v636, %v688
    %v690 = vpop.f32.mrf.mxu0
    %v691 = vpop.f32.mrf.mxu0
    %v692 = vpop.f32.mrf.mxu0
    %693 = vdwg.mxu0
    %v694 = vmax.f32 %v689, 0.0
    %s695 = scalar_lea.vmem %s7, 8
    %v696 = vld [vmem:[%s695] sm:$0xff]
    %vm697 = vcmp.lt.u32.totalorder %v696, 2147483648
    %v698 = vsel %vm697, %v694, 0.0
    %v699 = vpack.c.bf16 %v698, %v698
    %v700 = vld [vmem:[%s5] sm:$0xf]
    %v701 = vld [vmem:[%s5 + $0x4] sm:$0xf]
    %v702 = vld [vmem:[%s5 + $0x8] sm:$0xf]
    %v703 = vld [vmem:[%s5 + $0xc] sm:$0xf]
    %v704 = vld [vmem:[%s6] sm:$0x1]
    %v706 = vlaneseq
    %v707 = vshrl.u32 %v706, 7
    %v708 = vsub.s32 0, %v707
    %v709 = vrot.slane %v704, %v708
    %v715 = vunpack.c.l.b16 %v700
    %v716 = vunpack.c.l.b16 %v701
    %v717 = vunpack.c.l.b16 %v702
    %v718 = vunpack.c.l.b16 %v703
    %v719 = vpack.c.b16 %v716, %v715
    %v720 = vpack.c.b16 %v718, %v717
    %v724 = vsel %vm650, %v699, 0
    %726 = vmatprep.subr.bf16.mxu0 0
    %727 = vmatpush1.bf16.msra.mxu0 0
    %728 = vmatprep.subr.bf16.mxu0 0
    %729 = vmatpush1.bf16.msra.mxu0 0
    %730 = vmatprep.subr.bf16.mxu0 0
    %731 = vmatpush1.bf16.msra.mxu0 0
    %732 = vmatprep.subr.bf16.mxu0 0
    %733 = vmatpush1.bf16.msra.mxu0 0
    %734 = vmatprep.subr.bf16.mxu0 0
    %735 = vmatpush1.bf16.msra.mxu0 0
    %736 = vmatprep.subr.bf16.mxu0 0
    %737 = vmatpush1.bf16.msra.mxu0 0
    %738 = vmatprep.subr.bf16.mxu0 0
    %739 = vmatpush1.bf16.msra.mxu0 %v720
    %740 = vmatprep.subr.bf16.mxu0 0
    %741 = vmatpush1.bf16.msra.mxu0 %v719
    %742 = vmatprep.subr.bf16.mxu0 0
    %743 = vmatpush2.bf16.msra.mxu0 0
    %744 = vmatprep.subr.bf16.mxu0 0
    %745 = vmatpush2.bf16.msra.mxu0 0
    %746 = vmatprep.subr.bf16.mxu0 0
    %747 = vmatpush2.bf16.msra.mxu0 0
    %748 = vmatprep.subr.bf16.mxu0 0
    %749 = vmatpush2.bf16.msra.mxu0 0
    %750 = vmatprep.subr.bf16.mxu0 0
    %751 = vmatpush2.bf16.msra.mxu0 0
    %752 = vmatprep.subr.bf16.mxu0 0
    %753 = vmatpush2.bf16.msra.mxu0 0
    %754 = vmatprep.subr.bf16.mxu0 0
    %755 = vmatpush2.bf16.msra.mxu0 0
    %756 = vmatprep.subr.bf16.mxu0 0
    %757 = vmatpush2.bf16.msra.mxu0 0
    %758 = vmatprep.mubr.bf16.mxu0 0
    %759 = vmatmul.mubr.bf16.gmra.mxu0 %v724
    %v760 = vpop.f32.mrf.mxu0
    %v761 = vadd.f32 %v709, %v760
    %v762 = vpop.f32.mrf.mxu0
    %v763 = vpop.f32.mrf.mxu0
    %v764 = vpop.f32.mrf.mxu0
    %765 = vdwg.mxu0
    %766 = vmax.xlane.f32.xlu0 %v761
    %v767 = vpop.xlane.xlu0 %766
    %v768 = vsub.f32 %v761, %v767
    %v769 = vmul.f32 %v768, 1.442695
    %v770 = vpow.pop %v769
    %771 = vadd.xlane.f32.xlu0 %v770
    %v772 = vpop.xlane.xlu0 %771
    %v773 = vlog2.pop %v772
    %v774 = vmul.f32 %v773, 0.6931472
    %v775 = vsub.f32 %v768, %v774
    %776 = vst [vmem:[#allocation2] sm:$0xff] %v775
    // Predicated region
    $region34: #{tpu_custom_call.1} parent=1 // pred_check
      _
    $region35: #{tpu_custom_call.1} parent=1 // pred_check_branch
      %778 = sbr.rel (0) target = $region37
    $region36: #{tpu_custom_call.1} parent=1 // pred_region
      %s780 = ssub.s32 128, 128
      %781 = vsyncadd [#allocation3], %s780
      %s783 = sshll.u32 [#allocation2], 4
      %s784 = int_to_ptr.vmem [resolvable:$true] %s783
      %786 = dma.vmem_to_hbm [thread:$0]  %s784, 128, %s8, [#allocation3]
    $region37: #{tpu_custom_call.1} parent=1 // pred_fallthru
      _
    // Predicated region
    $region38: #{tpu_custom_call.1} parent=1 // pred_check
      _
    $region39: #{tpu_custom_call.1} parent=1 // pred_check_branch
      %788 = sbr.rel (0) target = $region41
    $region40: #{tpu_custom_call.1} parent=1 // pred_region
      %789 = dma.done [#allocation3], 128
    $region41: #{tpu_custom_call.1} parent=1 // pred_fallthru
      _
    %790 = vsyncpa [#allocation3], 1

</llo_original>
